<compile_context>
chip_gen: v7x
topology: tpu7x:2x2x1
jax: 0.10.0
libtpu: 0.0.40
codegen_flags: <defaults>
</compile_context>

<pallas_src>
import jax
import jax.numpy as jnp
from jax.experimental import pallas as pl
from jax.experimental.pallas import tpu as pltpu


def _round_up(x, m):
    return ((x + m - 1) // m) * m


def _pad2(x, rows, cols):
    r, c = x.shape
    if (r, c) == (rows, cols):
        return x
    return jnp.pad(x, ((0, rows - r), (0, cols - c)))


def _vmem_limit_bytes():
    """~75% of physical VMEM for this generation (fallback safe on v7x)."""
    try:
        cap = pltpu.get_tpu_info().vmem_capacity_bytes
        return max(32 * 1024 * 1024, int(cap) * 3 // 4)
    except Exception:
        return 48 * 1024 * 1024  # conservative: fits under v7x's 64 MiB


# ----------------------------------------------------------------- kernels --
def _mm_fullk_kernel(x_ref, wt_ref, o_ref):
    """Single-shot (tm, K) @ (K, tn) MXU tile; no accumulator needed."""
    o_ref[...] = jnp.dot(
        x_ref[...], wt_ref[...], preferred_element_type=jnp.float32
    ).astype(o_ref.dtype)


def _mm_ktiled_kernel(x_ref, wt_ref, o_ref, acc_ref):
    """K-tiled fallback for very large d_model: f32 VMEM accumulator."""
    @pl.when(pl.program_id(3) == 0)
    def _init():
        acc_ref[...] = jnp.zeros_like(acc_ref)

    acc_ref[...] += jnp.dot(
        x_ref[...], wt_ref[...], preferred_element_type=jnp.float32
    )

    @pl.when(pl.program_id(3) == pl.num_programs(3) - 1)
    def _finalize():
        o_ref[...] = acc_ref[...].astype(o_ref.dtype)


# ----------------------------------------------------------- tile planning --
def _plan_tiles(M, D, itemsize, out_itemsize, vmem_limit, sub):
    """Pick (tm, Mp, P, tn, tk).  P is padded d_model (K and per-proj N)."""
    # Row (sublane) axis: big tiles preferred; small M rounds up to the packed
    # sublane granularity of the compute dtype (16 for bf16, 32 for int8/fp8).
    tm = None
    for cand in (1024, 512, 256, 128):
        if M >= cand:
            tm = cand
            break
    if tm is None:
        tm = _round_up(M, sub)
        Mp = tm
    else:
        Mp = _round_up(M, tm)

    # d_model (lane) axis, shared by K (x last dim) and per-projection N.
    if D < 128 or D % 128 == 0:
        P = D
    else:
        P = _round_up(D, 128)

    # Output-column tile: prefer wide (>=256 fills the 256-wide v6e/v7x MXU).
    if P < 128:
        tn = P  # full-extent block (allowed by the (8,128) rule)
    else:
        tn = 128
        for cand in (1024, 512, 256):
            if P % cand == 0:
                tn = cand
                break

    # Full-K feasibility: double-buffered x / w / out blocks must fit with
    # generous headroom; otherwise fall back to K tiling + accumulator.
    need = 2 * (tm * P * itemsize + P * tn * itemsize + tm * tn * out_itemsize)
    if need <= int(0.6 * vmem_limit):
        tk = None
    else:
        tk = 128
        for cand in (2048, 1024, 512, 256):
            if P % cand == 0:
                tk = cand
                break
    return tm, Mp, P, tn, tk


# ------------------------------------------------------------------ driver --
def _batched_matmul(x_all, wt_all, out_dtype, tm, tn, tk, vmem_limit):
    """out[g] = x_all[g] @ wt_all[g] for g in range(G)."""
    G, Mp, Kp = x_all.shape
    _, _, Np = wt_all.shape

    if tk is None:
        # Full-K: no accumulator, no pl.when, 3-D grid, all axes parallel.
        grid = (G, Mp // tm, Np // tn)
        x_spec = pl.BlockSpec((None, tm, Kp), lambda g, i, j: (g, i, 0))
        w_spec = pl.BlockSpec((None, Kp, tn), lambda g, i, j: (g, 0, j))
        o_spec = pl.BlockSpec((None, tm, tn), lambda g, i, j: (g, i, j))
        return pl.pallas_call(
            _mm_fullk_kernel,
            out_shape=jax.ShapeDtypeStruct((G, Mp, Np), out_dtype),
            grid=grid,
            in_specs=[x_spec, w_spec],
            out_specs=o_spec,
            compiler_params=pltpu.CompilerParams(
                dimension_semantics=("parallel", "parallel", "parallel"),
                vmem_limit_bytes=vmem_limit,
            ),
        )(x_all, wt_all)

    # K-tiled fallback (huge d_model): innermost "arbitrary" reduction axis.
    grid = (G, Mp // tm, Np // tn, Kp // tk)
    x_spec = pl.BlockSpec((None, tm, tk), lambda g, i, j, kk: (g, i, kk))
    w_spec = pl.BlockSpec((None, tk, tn), lambda g, i, j, kk: (g, kk, j))
    o_spec = pl.BlockSpec((None, tm, tn), lambda g, i, j, kk: (g, i, j))
    return pl.pallas_call(
        _mm_ktiled_kernel,
        out_shape=jax.ShapeDtypeStruct((G, Mp, Np), out_dtype),
        grid=grid,
        in_specs=[x_spec, w_spec],
        out_specs=o_spec,
        scratch_shapes=[pltpu.VMEM((tm, tn), jnp.float32)],
        compiler_params=pltpu.CompilerParams(
            dimension_semantics=("parallel", "parallel", "parallel",
                                 "arbitrary"),
            vmem_limit_bytes=vmem_limit,
        ),
    )(x_all, wt_all)


# ----------------------------------------------------------------- wrapper --
def wqkv_forward(q, k, v, wq, wk, wv, nhead, use_flash_attn=False,
                 compute_dtype=jnp.bfloat16):
    """WQKV.forward: q/k/v projections + head split.

    q, k, v: (b, s, d_model); wq, wk, wv: (d_model, d_model) PyTorch (out, in).
    compute_dtype: MXU input dtype (default bf16); accumulation stays f32 and
      the output keeps the input dtype.
    Returns (q, k, v), each (b, s, h, d) if use_flash_attn else (b, h, s, d).
    """
    b, s, d_model = q.shape
    assert d_model % nhead == 0
    head_dim = d_model // nhead
    M = b * s
    out_dtype = q.dtype

    cd = compute_dtype if compute_dtype is not None else q.dtype
    itemsize = jnp.dtype(cd).itemsize
    sub = max(8, 32 // itemsize)  # packed sublane granularity for this dtype

    vmem_limit = _vmem_limit_bytes()
    tm, Mp, P, tn, tk = _plan_tiles(M, d_model, itemsize,
                                    jnp.dtype(out_dtype).itemsize,
                                    vmem_limit, sub)

    # Self-attention: q/k/v share the same tensor -> fuse the 3 projections
    # into one matmul against the column-concatenated weights (activations
    # read from HBM once, no 3-way activation stack).
    fused = (q is k) and (k is v)

    # Cast FIRST, pad/stack second: wrapper copies move compute-dtype bytes.
    def _prep_x(x):
        return _pad2(x.reshape(M, d_model).astype(cd), Mp, P)

    def _prep_w(w):
        # Pre-transpose PyTorch (out, in) -> (in, out) once, outside the kernel.
        return _pad2(w.T.astype(cd), P, P)

    if fused:
        if P < 128:
            tn = 3 * P  # keep the lane dim a single full-extent block
        x_all = _prep_x(q)[None]                                  # (1, Mp, P)
        wt_all = jnp.concatenate(
            [_prep_w(wq), _prep_w(wk), _prep_w(wv)], axis=1)[None]  # (1,P,3P)
    else:
        x_all = jnp.stack([_prep_x(q), _prep_x(k), _prep_x(v)])      # (3,Mp,P)
        wt_all = jnp.stack([_prep_w(wq), _prep_w(wk), _prep_w(wv)])  # (3,P,P)

    out = _batched_matmul(x_all, wt_all, out_dtype, tm, tn, tk, vmem_limit)

    if fused:
        flat = out[0]
        parts = [flat[:M, g * P: g * P + d_model] for g in range(3)]
    else:
        parts = [out[g, :M, :d_model] for g in range(3)]

    def _shape(y):
        y = y.reshape(b, s, nhead, head_dim)
        if not use_flash_attn:
            # TODO(synk): for head_dim >= 128 fold this transpose into the
            # output BlockSpec (write (b,h,s,d) directly, lane-dense); for
            # small head_dim the post-kernel glue beats masked stores.
            y = jnp.transpose(y, (0, 2, 1, 3))
        return y

    qo, ko, vo = (_shape(p) for p in parts)
    return qo, ko, vo


def _kaiming_uniform_linear(key, out_features, in_features, dtype=jnp.float32):
    # nn.Linear default: kaiming_uniform_(a=sqrt(5)) => U(-b, b), b=1/sqrt(fan_in)
    bound = 1.0 / jnp.sqrt(jnp.asarray(in_features, jnp.float32))
    return jax.random.uniform(
        key, (out_features, in_features), dtype=dtype, minval=-bound, maxval=bound
    )


if __name__ == "__main__":
    d_model = 32
    nhead = 4
    batch = 2
    seq = 8

    key = jax.random.PRNGKey(0)
    kq, kk_, kv_, kwq, kwk, kwv = jax.random.split(key, 6)

    q = jax.random.normal(kq, (batch, seq, d_model), dtype=jnp.float32)
    k = jax.random.normal(kk_, (batch, seq, d_model), dtype=jnp.float32)
    v = jax.random.normal(kv_, (batch, seq, d_model), dtype=jnp.float32)

    Wq = _kaiming_uniform_linear(kwq, d_model, d_model)
    Wk = _kaiming_uniform_linear(kwk, d_model, d_model)
    Wv = _kaiming_uniform_linear(kwv, d_model, d_model)

    def ref(x, w, flash):
        y = jnp.einsum('bsd,od->bso', x, w)  # nn.Linear: y = x @ W.T
        y = y.reshape(batch, seq, nhead, d_model // nhead)
        return y if flash else jnp.transpose(y, (0, 2, 1, 3))

    # 1) Default bf16 compute path, distinct q/k/v -> g-stacked kernel.
    qo, ko, vo = wqkv_forward(q, k, v, Wq, Wk, Wv, nhead, use_flash_attn=False)
    jax.block_until_ready((qo, ko, vo))
    assert qo.shape == (batch, nhead, seq, d_model // nhead)
    assert jnp.allclose(qo, ref(q, Wq, False), atol=3e-2, rtol=3e-2)
    assert jnp.allclose(ko, ref(k, Wk, False), atol=3e-2, rtol=3e-2)
    assert jnp.allclose(vo, ref(v, Wv, False), atol=3e-2, rtol=3e-2)

    # 2) f32 compute path (tight tolerance), flash-attn head layout.
    qo32, ko32, vo32 = wqkv_forward(q, k, v, Wq, Wk, Wv, nhead,
                                    use_flash_attn=True,
                                    compute_dtype=jnp.float32)
    jax.block_until_ready((qo32, ko32, vo32))
    assert qo32.shape == (batch, seq, nhead, d_model // nhead)
    assert jnp.allclose(qo32, ref(q, Wq, True), atol=1e-5)
    assert jnp.allclose(ko32, ref(k, Wk, True), atol=1e-5)
    assert jnp.allclose(vo32, ref(v, Wv, True), atol=1e-5)

    # 3) Shared q=k=v (self-attention) -> fused single-matmul path.
    qs, ks, vs = wqkv_forward(q, q, q, Wq, Wk, Wv, nhead, use_flash_attn=False)
    jax.block_until_ready((qs, ks, vs))
    assert jnp.allclose(qs, ref(q, Wq, False), atol=3e-2, rtol=3e-2)
    assert jnp.allclose(ks, ref(q, Wk, False), atol=3e-2, rtol=3e-2)
    assert jnp.allclose(vs, ref(q, Wv, False), atol=3e-2, rtol=3e-2)

    print("KERNEL_OK")
</pallas_src>

<mosaic_0001>
module attributes {stable_mosaic.version = 11 : i64} {
  func.func @_mm_fullk_kernel(%arg0: i32, %arg1: i32, %arg2: i32, %arg3: memref<1x16x32xbf16, #tpu.memory_space<vmem>>, %arg4: memref<1x32x32xbf16, #tpu.memory_space<vmem>>, %arg5: memref<1x16x32xf32, #tpu.memory_space<vmem>>) attributes {dimension_semantics = [#tpu.dimension_semantics<parallel>, #tpu.dimension_semantics<parallel>, #tpu.dimension_semantics<parallel>], iteration_bounds = array<i64: 3, 1, 1>, scalar_prefetch = 0 : i64, scratch_operands = 0 : i64, tpu.core_type = #tpu.core_type<tc>, window_params = [{transform_indices = @transform_0, window_bounds = array<i64: 1, 16, 32>}, {transform_indices = @transform_1, window_bounds = array<i64: 1, 32, 32>}, {transform_indices = @transform_2, window_bounds = array<i64: 1, 16, 32>}]} {
    %c0 = arith.constant 0 : index
    %c0_0 = arith.constant 0 : index
    %c0_1 = arith.constant 0 : index
    %0 = vector.load %arg3[%c0, %c0_0, %c0_1] : memref<1x16x32xbf16, #tpu.memory_space<vmem>>, vector<1x16x32xbf16>
    %1 = vector.shape_cast %0 : vector<1x16x32xbf16> to vector<16x32xbf16>
    %c0_2 = arith.constant 0 : index
    %c0_3 = arith.constant 0 : index
    %c0_4 = arith.constant 0 : index
    %2 = vector.load %arg4[%c0_2, %c0_3, %c0_4] : memref<1x32x32xbf16, #tpu.memory_space<vmem>>, vector<1x32x32xbf16>
    %3 = vector.shape_cast %2 : vector<1x32x32xbf16> to vector<32x32xbf16>
    %cst = arith.constant dense<0.000000e+00> : vector<16x32xf32>
    %4 = tpu.matmul %1, %3, %cst {dimension_numbers = #tpu.dot_dimension_numbers<[1], [0], [0], [1], [0, 0, 1, 1], [], []>} : vector<16x32xbf16>, vector<32x32xbf16>, vector<16x32xf32> -> vector<16x32xf32>
    %c0_5 = arith.constant 0 : index
    %c0_6 = arith.constant 0 : index
    %c0_7 = arith.constant 0 : index
    %5 = vector.load %arg5[%c0_5, %c0_6, %c0_7] : memref<1x16x32xf32, #tpu.memory_space<vmem>>, vector<1x16x32xf32>
    %6 = vector.shape_cast %5 : vector<1x16x32xf32> to vector<16x32xf32>
    %7 = vector.shape_cast %4 : vector<16x32xf32> to vector<1x16x32xf32>
    tpu.vector_store %arg5[%c0_5, %c0_6, %c0_7], %7 {strides = array<i32>} : memref<1x16x32xf32, #tpu.memory_space<vmem>>, vector<1x16x32xf32>,
    return
  }
  func.func @transform_0(%arg0: i32, %arg1: i32, %arg2: i32) -> (i32, i32, i32) {
    %c0_i32 = arith.constant 0 : i32
    %c0_i32_0 = arith.constant 0 : i32
    return %arg0, %arg1, %c0_i32 : i32, i32, i32
  }
  func.func @transform_1(%arg0: i32, %arg1: i32, %arg2: i32) -> (i32, i32, i32) {
    %c0_i32 = arith.constant 0 : i32
    %c0_i32_0 = arith.constant 0 : i32
    return %arg0, %c0_i32, %arg2 : i32, i32, i32
  }
  func.func @transform_2(%arg0: i32, %arg1: i32, %arg2: i32) -> (i32, i32, i32) {
    %c0_i32 = arith.constant 0 : i32
    return %arg0, %arg1, %arg2 : i32, i32, i32
  }
}

</mosaic_0001>

<llo_original>
// kernel: tpu_custom_call.1
$region0: #{tpu_custom_call.1}
  #allocation0 [shape = 'u32[]', space=smem, size = 0x4, offset = 0x4, fixed_abs, tag = 'smem constant byte address 0x4 - core index']
  #allocation1 [shape = 'u32[144,128]{1,0:T(1,128)}', space=vmem, size = 0x12000, scoped, tag = 'internal scratch']
  %s0 = inlined_call_operand.hbm [shape: bf16[3,16,32], index: 0, kind: input, shape index: {}]
  %s1 = inlined_call_operand.hbm [shape: bf16[3,32,32], index: 1, kind: input, shape index: {}]
  %s2 = inlined_call_operand.hbm [shape: f32[3,16,32], index: 2, kind: output, shape index: {}]
  %s3 = sld [smem:[#allocation0]]
  $region49: #{tpu_custom_call.1} parent=0
    _
  %s5 = ssub.s32 1, %s3
  %s6 = scalar_select 0, %s5, %s3
  $region1: #{tpu_custom_call.1} parent=0
    #allocation2 [shape = 'u8[8192]{0}', space=vmem, size = 0x2000, scoped, tag = 'input window, operand 0']
    #allocation3 [shape = 's32[2]{0}', space=sflag, size = 0x8, scoped, tag = 'scoped memory for tpu_custom_call.1']
    #allocation4 [shape = 's32[2]{0}', space=sflag, size = 0x8, scoped, tag = 'scoped memory for tpu_custom_call.1']
    #allocation5 [shape = 'u8[16384]{0}', space=vmem, size = 0x4000, scoped, tag = 'input window, operand 1']
    #allocation6 [shape = 's32[2]{0}', space=sflag, size = 0x8, scoped, tag = 'scoped memory for tpu_custom_call.1']
    #allocation7 [shape = 'u8[16384]{0}', space=vmem, size = 0x4000, scoped, tag = 'output window, operand 0']
    %7 = vsyncpa [#allocation3], 0
    %s8 = scalar_lea.sflag [#allocation3], 1
    %9 = vsyncpa %s8, 0
    %10 = vsyncpa [#allocation6], 0
    %s11 = scalar_lea.sflag [#allocation6], 1
    %12 = vsyncpa %s11, 0
    %13 = vsyncpa [#allocation4], 0
    %s14 = scalar_lea.sflag [#allocation4], 1
    %15 = vsyncpa %s14, 0
    loop: start=0, step=1, limit=5
    $region2: #{tpu_custom_call.1} parent=1 // loop_pre_header
      _
    $region3: #{tpu_custom_call.1} parent=1 // loop_header
      %s17 = sphi 0, %s21
      %p18 = scmp.ge.s32.totalorder %s17, 5
      %s24 = sphi 0, %s43
      %s25 = sphi 0, %s39
      %s26 = sphi 0, %s35
      %s27 = sphi 0, %s24
      %s28 = sphi 0, %s25
      %s29 = sphi 0, %s26
      %s30 = sphi 0, %s27
      %s31 = sphi 0, %s28
      %s32 = sphi 0, %s29
      %s48 = sphi 0, %s50
      %s51 = sphi 0, %s48
      %s52 = sphi 0, %s51
      %s68 = sphi 0, %s52
      %s76 = sphi 0, %s78
      %s79 = sphi 0, %s76
      %s80 = sphi 0, %s79
      %s96 = sphi 0, %s80
      %s106 = sphi 0, %s108
      %s109 = sphi 0, %s106
      %s110 = sphi 0, %s109
      %s126 = sphi 0, %s110
    $region4: #{tpu_custom_call.1} parent=1 // loop_header_branch
      %20 = sbr.rel (%p18) target = $region8
    $region5: #{tpu_custom_call.1} parent=1 // loop_body
      %s22 = ssub.s32 %s17, 1
      %s23 = ssub.s32 %s17, 2
      %s33 = sadd.s32 1, %s26
      %p34 = scmp.ge.s32.totalorder %s33, 1
      %s35 = scalar_select %p34, 0, %s33
      %s36 = sadd.s32 1, %s25
      %s37 = scalar_select %p34, %s36, %s25
      %p38 = scmp.ge.s32.totalorder %s37, 1
      %s39 = scalar_select %p38, 0, %s37
      %s40 = sadd.s32 1, %s24
      %s41 = scalar_select %p38, %s40, %s24
      %p42 = scmp.ge.s32.totalorder %s41, 3
      %s43 = scalar_select %p42, 0, %s41
      %s44 = ssub.s32 %s24, %s43
      %s45 = ssub.s32 %s25, %s39
      %s46 = sor.u32 %s44, %s45
      %p47 = scmp.eq.s32.totalorder %s46, 0
      %s49 = sadd.s32 %s48, 1
      %s50 = scalar_select %p47, %s48, %s49
      %p53 = pneg %p47
      %p54 = scmp.eq.s32.totalorder %s17, 2
      %p55 = por %p53, %p54
      %p56 = scmp.ne.s32.totalorder %s48, %s51
      %p57 = scmp.eq.s32.totalorder %s17, 0
      %p58 = por %p56, %p57
      %p59 = scmp.ne.s32.totalorder %s48, %s51
      %p60 = scmp.eq.s32.totalorder %s22, 2
      %p61 = por %p59, %p60
      %p62 = scmp.ne.s32.totalorder %s51, %s52
      %p63 = scmp.eq.s32.totalorder %s22, 0
      %p64 = por %p62, %p63
      %p65 = scmp.ne.s32.totalorder %s51, %s52
      %p66 = scmp.eq.s32.totalorder %s23, 2
      %p67 = por %p65, %p66
      %p69 = scmp.ne.s32.totalorder %s52, %s68
      %p70 = scmp.eq.s32.totalorder %s23, 0
      %p71 = por %p69, %p70
      %s72 = ssub.s32 %s24, %s43
      %s73 = ssub.s32 %s26, %s35
      %s74 = sor.u32 %s72, %s73
      %p75 = scmp.eq.s32.totalorder %s74, 0
      %s77 = sadd.s32 %s76, 1
      %s78 = scalar_select %p75, %s76, %s77
      %p81 = pneg %p75
      %p82 = scmp.eq.s32.totalorder %s17, 2
      %p83 = por %p81, %p82
      %p84 = scmp.ne.s32.totalorder %s76, %s79
      %p85 = scmp.eq.s32.totalorder %s17, 0
      %p86 = por %p84, %p85
      %p87 = scmp.ne.s32.totalorder %s76, %s79
      %p88 = scmp.eq.s32.totalorder %s22, 2
      %p89 = por %p87, %p88
      %p90 = scmp.ne.s32.totalorder %s79, %s80
      %p91 = scmp.eq.s32.totalorder %s22, 0
      %p92 = por %p90, %p91
      %p93 = scmp.ne.s32.totalorder %s79, %s80
      %p94 = scmp.eq.s32.totalorder %s23, 2
      %p95 = por %p93, %p94
      %p97 = scmp.ne.s32.totalorder %s80, %s96
      %p98 = scmp.eq.s32.totalorder %s23, 0
      %p99 = por %p97, %p98
      %s100 = ssub.s32 %s24, %s43
      %s101 = ssub.s32 %s25, %s39
      %s102 = sor.u32 %s100, %s101
      %s103 = ssub.s32 %s26, %s35
      %s104 = sor.u32 %s102, %s103
      %p105 = scmp.eq.s32.totalorder %s104, 0
      %s107 = sadd.s32 %s106, 1
      %s108 = scalar_select %p105, %s106, %s107
      %p111 = pneg %p105
      %p112 = scmp.eq.s32.totalorder %s17, 2
      %p113 = por %p111, %p112
      %p114 = scmp.ne.s32.totalorder %s106, %s109
      %p115 = scmp.eq.s32.totalorder %s17, 0
      %p116 = por %p114, %p115
      %p117 = scmp.ne.s32.totalorder %s106, %s109
      %p118 = scmp.eq.s32.totalorder %s22, 2
      %p119 = por %p117, %p118
      %p120 = scmp.ne.s32.totalorder %s109, %s110
      %p121 = scmp.eq.s32.totalorder %s22, 0
      %p122 = por %p120, %p121
      %p123 = scmp.ne.s32.totalorder %s109, %s110
      %p124 = scmp.eq.s32.totalorder %s23, 2
      %p125 = por %p123, %p124
      %p127 = scmp.ne.s32.totalorder %s110, %s126
      %p128 = scmp.eq.s32.totalorder %s23, 0
      %p129 = por %p127, %p128
      %p130 = scmp.le.s32.totalorder 1, %s17
      %p131 = scmp.lt.s32.totalorder %s17, 4
      %p132 = pnand %p130, %p131
      %p133 = pneg %p132
      // Predicated region
      $region9: #{tpu_custom_call.1} parent=5 // pred_check
        _
      $region10: #{tpu_custom_call.1} parent=5 // pred_check_branch
        %135 = sbr.rel (%p132) target = $region12
      $region11: #{tpu_custom_call.1} parent=5 // pred_region
        %s136 = ssub.s32 %s17, 1
      $region12: #{tpu_custom_call.1} parent=5 // pred_fallthru
        _
      %p137 = scmp.lt.s32.totalorder %s17, 3
      // Predicated region
      $region13: #{tpu_custom_call.1} parent=5 // pred_check
        %p138 = pneg %p137
      $region14: #{tpu_custom_call.1} parent=5 // pred_check_branch
        %140 = sbr.rel (%p138) target = $region16
      $region15: #{tpu_custom_call.1} parent=5 // pred_region
        // Predicated region
        $region17: #{tpu_custom_call.1} parent=15 // pred_check
          %p141 = pneg %p58
        $region18: #{tpu_custom_call.1} parent=15 // pred_check_branch
          %143 = sbr.rel (%p141) target = $region20
        $region19: #{tpu_custom_call.1} parent=15 // pred_region
          %s144 = sand.u32 %s48, 1
          %s145 = scalar_lea.sflag [#allocation3], %s144
          %s146 = sand.u32 %s48, 1
          %s147 = smul.addr %s146, 8
          %s148 = scalar_lea.vmem [#allocation2], %s147
          %s149 = smul.u32 2, %s25
          %s151 = ssub.s32 128, 128
          %152 = vsyncadd %s145, %s151
          %s153 = smul.addr %s24, 2
          %s154 = sadd.s32 %s149, %s153
          %s155 = smul.addr %s154, 64
          %s156 = scalar_lea.hbm %s0, %s155
          %s157 = sshll.u32 %s148, 4
          %s158 = int_to_ptr.vmem [resolvable:$true] %s157
          %163 = dma.hbm_to_vmem [thread:$0]  %s156, 128, %s158, %s145, 64, 64, 4
        $region20: #{tpu_custom_call.1} parent=15 // pred_fallthru
          _
        // Predicated region
        $region21: #{tpu_custom_call.1} parent=15 // pred_check
          %p164 = pneg %p86
        $region22: #{tpu_custom_call.1} parent=15 // pred_check_branch
          %166 = sbr.rel (%p164) target = $region24
        $region23: #{tpu_custom_call.1} parent=15 // pred_region
          %s167 = sand.u32 %s76, 1
          %s168 = scalar_lea.sflag [#allocation6], %s167
          %s169 = sand.u32 %s76, 1
          %s170 = smul.addr %s169, 16
          %s171 = scalar_lea.vmem [#allocation5], %s170
          %s173 = ssub.s32 256, 256
          %174 = vsyncadd %s168, %s173
          %s175 = smul.addr %s24, 4
          %s176 = sadd.s32 %s26, %s175
          %s177 = smul.addr %s176, 64
          %s178 = scalar_lea.hbm %s1, %s177
          %s179 = sshll.u32 %s171, 4
          %s180 = int_to_ptr.vmem [resolvable:$true] %s179
          %185 = dma.hbm_to_vmem [thread:$0]  %s178, 256, %s180, %s168, 64, 64, 4
        $region24: #{tpu_custom_call.1} parent=15 // pred_fallthru
          _
      $region16: #{tpu_custom_call.1} parent=5 // pred_fallthru
        _
      %p186 = scmp.le.s32.totalorder 1, %s17
      %p187 = scmp.lt.s32.totalorder %s17, 4
      %p188 = pnand %p186, %p187
      %p189 = pneg %p188
      // Predicated region
      $region25: #{tpu_custom_call.1} parent=5 // pred_check
        _
      $region26: #{tpu_custom_call.1} parent=5 // pred_check_branch
        %191 = sbr.rel (%p188) target = $region28
      $region27: #{tpu_custom_call.1} parent=5 // pred_region
        %s192 = ssub.s32 %s17, 1
        %s193 = sand.u32 %s51, 1
        %s194 = scalar_lea.sflag [#allocation3], %s193
        %s195 = sand.u32 %s51, 1
        %s196 = smul.addr %s195, 8
        %s197 = scalar_lea.vmem [#allocation2], %s196
        // Predicated region
        $region29: #{tpu_custom_call.1} parent=27 // pred_check
          %p198 = pneg %p64
        $region30: #{tpu_custom_call.1} parent=27 // pred_check_branch
          %200 = sbr.rel (%p198) target = $region32
        $region31: #{tpu_custom_call.1} parent=27 // pred_region
          %201 = dma.done %s194, 128
        $region32: #{tpu_custom_call.1} parent=27 // pred_fallthru
          _
        %s202 = sand.u32 %s79, 1
        %s203 = scalar_lea.sflag [#allocation6], %s202
        %s204 = sand.u32 %s79, 1
        %s205 = smul.addr %s204, 16
        %s206 = scalar_lea.vmem [#allocation5], %s205
        // Predicated region
        $region33: #{tpu_custom_call.1} parent=27 // pred_check
          %p207 = pneg %p92
        $region34: #{tpu_custom_call.1} parent=27 // pred_check_branch
          %209 = sbr.rel (%p207) target = $region36
        $region35: #{tpu_custom_call.1} parent=27 // pred_region
          %210 = dma.done %s203, 256
        $region36: #{tpu_custom_call.1} parent=27 // pred_fallthru
          _
        %s211 = sand.u32 %s51, 1
        %s212 = scalar_lea.sflag [#allocation3], %s211
        %s213 = sand.u32 %s51, 1
        %s214 = smul.addr %s213, 8
        %s215 = scalar_lea.vmem [#allocation2], %s214
        %p216 = pneg %p64
        %p217 = pneg %p61
        %s218 = sand.u32 %s79, 1
        %s219 = scalar_lea.sflag [#allocation6], %s218
        %s220 = sand.u32 %s79, 1
        %s221 = smul.addr %s220, 16
        %s222 = scalar_lea.vmem [#allocation5], %s221
        %p223 = pneg %p92
        %p224 = pneg %p89
        %p225 = pneg %p122
        %p226 = pneg %p119
        %s227 = sand.u32 %s109, 1
        %s228 = scalar_lea.sflag [#allocation4], %s227
        %s229 = sand.u32 %s109, 1
        %s230 = smul.addr %s229, 16
        %s231 = scalar_lea.vmem [#allocation7], %s230
        %s232 = smul.u32 2, %s28
        %s233 = smul.u32 2, %s28
        %v235 = vld [vmem:[%s197] sm:$0xf]
        %v236 = vld [vmem:[%s197 + $0x4] sm:$0xf]
        %v237 = vld [vmem:[%s206] sm:$0xf]
        %v238 = vld [vmem:[%s206 + $0x4] sm:$0xf]
        %v239 = vld [vmem:[%s206 + $0x8] sm:$0xf]
        %v240 = vld [vmem:[%s206 + $0xc] sm:$0xf]
        %v243 = vunpack.c.l.b16 %v235
        %v244 = vunpack.c.l.b16 %v236
        %v245 = vpack.c.b16 %v244, %v243
        %v250 = vunpack.c.l.b16 %v237
        %v251 = vunpack.c.l.b16 %v238
        %v252 = vunpack.c.l.b16 %v239
        %v253 = vunpack.c.l.b16 %v240
        %v254 = vpack.c.b16 %v251, %v250
        %v255 = vpack.c.b16 %v253, %v252
        %vm258 = vcmask 261120
        %v260 = vsel %vm258, %v245, 0
        %262 = vmatprep.subr.bf16.mxu0 0
        %263 = vmatpush1.bf16.msra.mxu0 %v254
        %264 = vmatprep.subr.bf16.mxu0 0
        %265 = vmatpush1.bf16.msra.mxu0 %v255
        %266 = vmatprep.subr.bf16.mxu0 0
        %267 = vmatpush1.bf16.msra.mxu0 0
        %268 = vmatprep.subr.bf16.mxu0 0
        %269 = vmatpush1.bf16.msra.mxu0 0
        %270 = vmatprep.subr.bf16.mxu0 0
        %271 = vmatpush1.bf16.msra.mxu0 0
        %272 = vmatprep.subr.bf16.mxu0 0
        %273 = vmatpush1.bf16.msra.mxu0 0
        %274 = vmatprep.subr.bf16.mxu0 0
        %275 = vmatpush1.bf16.msra.mxu0 0
        %276 = vmatprep.subr.bf16.mxu0 0
        %277 = vmatpush1.bf16.msra.mxu0 0
        %278 = vmatprep.subr.bf16.mxu0 0
        %279 = vmatpush1.bf16.msra.mxu0 0
        %280 = vmatprep.subr.bf16.mxu0 0
        %281 = vmatpush1.bf16.msra.mxu0 0
        %282 = vmatprep.subr.bf16.mxu0 0
        %283 = vmatpush1.bf16.msra.mxu0 0
        %284 = vmatprep.subr.bf16.mxu0 0
        %285 = vmatpush1.bf16.msra.mxu0 0
        %286 = vmatprep.subr.bf16.mxu0 0
        %287 = vmatpush1.bf16.msra.mxu0 0
        %288 = vmatprep.subr.bf16.mxu0 0
        %289 = vmatpush1.bf16.msra.mxu0 0
        %290 = vmatprep.subr.bf16.mxu0 0
        %291 = vmatpush1.bf16.msra.mxu0 0
        %292 = vmatprep.subr.bf16.mxu0 0
        %293 = vmatpush1.bf16.msra.mxu0 0
        %294 = vmatprep.mubr.bf16.mxu0 0
        %295 = vmatmul.mubr.bf16.gmra.mrb[0].mxu0 %v260
        %v296 = vpop.f32.mrb[0].mxu0
        %v297 = vadd.f32 0.0, %v296
        %v298 = vpop.f32.mrb[0].mxu0
        %v299 = vpop.f32.mrb[0].mxu0
        %v300 = vadd.f32 0.0, %v299
        %v301 = vpop.f32.mrb[0].mxu0
        %302 = vdwg.mxu0
        %303 = vst.msk [vmem:[%s231] sm:$0xff] %vm258, %v297
        %304 = vst.msk [vmem:[%s231 + $0x8] sm:$0xff] %vm258, %v300
        %s305 = sand.u32 %s109, 1
        %s306 = scalar_lea.sflag [#allocation4], %s305
        %s307 = sand.u32 %s109, 1
        %s308 = smul.addr %s307, 16
        %s309 = scalar_lea.vmem [#allocation7], %s308
        // Predicated region
        $region37: #{tpu_custom_call.1} parent=27 // pred_check
          %p310 = pneg %p119
        $region38: #{tpu_custom_call.1} parent=27 // pred_check_branch
          %312 = sbr.rel (%p310) target = $region40
        $region39: #{tpu_custom_call.1} parent=27 // pred_region
          %s313 = smul.u32 2, %s28
          %s315 = ssub.s32 256, 256
          %316 = vsyncadd %s306, %s315
          %s317 = sadd.s32 %s29, %s313
          %s318 = smul.addr %s27, 2
          %s319 = sadd.s32 %s317, %s318
          %s320 = smul.addr %s319, 128
          %s321 = scalar_lea.hbm %s2, %s320
          %s322 = sshll.u32 %s309, 4
          %s323 = int_to_ptr.vmem [resolvable:$true] %s322
          %328 = dma.vmem_to_hbm [thread:$0]  %s323, 256, %s321, %s306, 128, 128, 8
        $region40: #{tpu_custom_call.1} parent=27 // pred_fallthru
          _
      $region28: #{tpu_custom_call.1} parent=5 // pred_fallthru
        _
      %p329 = scmp.le.s32.totalorder 2, %s17
      // Predicated region
      $region41: #{tpu_custom_call.1} parent=5 // pred_check
        %p330 = pneg %p329
      $region42: #{tpu_custom_call.1} parent=5 // pred_check_branch
        %332 = sbr.rel (%p330) target = $region44
      $region43: #{tpu_custom_call.1} parent=5 // pred_region
        %s333 = ssub.s32 %s17, 2
        // Predicated region
        $region45: #{tpu_custom_call.1} parent=43 // pred_check
          %p334 = pneg %p125
        $region46: #{tpu_custom_call.1} parent=43 // pred_check_branch
          %336 = sbr.rel (%p334) target = $region48
        $region47: #{tpu_custom_call.1} parent=43 // pred_region
          %s337 = sand.u32 %s110, 1
          %s338 = scalar_lea.sflag [#allocation4], %s337
          %s339 = sand.u32 %s110, 1
          %s340 = smul.addr %s339, 16
          %s341 = scalar_lea.vmem [#allocation7], %s340
          %342 = dma.done %s338, 256
        $region48: #{tpu_custom_call.1} parent=43 // pred_fallthru
          _
      $region44: #{tpu_custom_call.1} parent=5 // pred_fallthru
        _
    $region6: #{tpu_custom_call.1} parent=1 // loop_footer
      %s21 = sadd.s32 1, %s17
    $region7: #{tpu_custom_call.1} parent=1 // loop_footer_branch
      %16 = sbr.rel target = $region3
    $region8: #{tpu_custom_call.1} parent=1 // loop_exit
      _
    %343 = vsyncpa [#allocation3], 1
    %s344 = scalar_lea.sflag [#allocation3], 1
    %345 = vsyncpa %s344, 1
    %346 = vsyncpa [#allocation6], 1
    %s347 = scalar_lea.sflag [#allocation6], 1
    %348 = vsyncpa %s347, 1
    %349 = vsyncpa [#allocation4], 1
    %s350 = scalar_lea.sflag [#allocation4], 1
    %351 = vsyncpa %s350, 1

</llo_original>
